<compile_context>
chip_gen: v5e
topology: v5e:2x2
jax: 0.10.0
libtpu: 0.0.40
codegen_flags: <defaults>
</compile_context>

<pallas_src>
import jax
import jax.numpy as jnp
from jax.experimental import pallas as pl
from jax.experimental.pallas import tpu as pltpu


def _round_up(x, m):
    return (x + m - 1) // m * m


# ---------------------------------------------------------------------------
# Generation detection & per-generation defaults
# ---------------------------------------------------------------------------
def _tpu_generation():
    try:
        kind = jax.devices()[0].device_kind.lower()
    except Exception:
        return "unknown"
    if "v6" in kind:
        return "v6e"
    if "7" in kind:           # "TPU7x" / "TPU v7..."
        return "v7x"
    if "v5 lite" in kind or "v5e" in kind or "v5lite" in kind:
        return "v5e"
    if "v5" in kind:
        return "v5p"
    return "unknown"


# tm: row tile (arithmetic intensity ~ tm), tk: intermediate-dim chunk,
# act_dtype: dtype for the silu(gate)*up epilogue (bf16 only where the VPU/EUP
# have native bf16), vmem_fallback: scoped-VMEM budget if get_tpu_info fails.
_GEN_CFG = {
    "v5e":     dict(tm=512, tk=512, act_dtype=jnp.float32,  vmem_fallback=96 << 20),
    "v5p":     dict(tm=768, tk=512, act_dtype=jnp.float32,  vmem_fallback=96 << 20),
    "v6e":     dict(tm=768, tk=512, act_dtype=jnp.bfloat16, vmem_fallback=96 << 20),
    "v7x":     dict(tm=512, tk=256, act_dtype=jnp.bfloat16, vmem_fallback=48 << 20),
    "unknown": dict(tm=512, tk=256, act_dtype=jnp.float32,  vmem_fallback=None),
}


def _tpu_config():
    gen = _tpu_generation()
    return gen, _GEN_CFG[gen]


def _vmem_budget(cfg):
    try:
        return int(pltpu.get_tpu_info().vmem_capacity_bytes * 3 // 4)
    except Exception:
        return cfg["vmem_fallback"]


# ---------------------------------------------------------------------------
# Kernel: one (tm, Hp) row tile x one tk-wide intermediate chunk.
# grid = (M_tiles, I_chunks); the I axis is the reduction axis of the down
# projection, accumulated into the fp32 VMEM scratch `acc_ref`.
# ---------------------------------------------------------------------------
def _make_swiglu_kernel(act_dtype):
    def kernel(x_ref, wgu_ref, wd_ref, o_ref, acc_ref):
        k = pl.program_id(1)
        tk = wd_ref.shape[0]

        x = x_ref[...]                                                  # (tm, Hp) bf16
        # Fused gate/up projection: one MXU matmul of width 2*tk, fp32 acc.
        y = jnp.dot(x, wgu_ref[...], preferred_element_type=jnp.float32)  # (tm, 2tk)
        # tk is a multiple of 128 -> lane-aligned, free slices.
        gate = y[:, :tk].astype(act_dtype)
        up = y[:, tk:].astype(act_dtype)
        # swish(gate) * up : sigmoid on the EUP, multiplies on the VPU
        # (bf16 on v6e/v7x halves VMEM temporaries + vld/vst traffic).
        h = (gate * jax.nn.sigmoid(gate)) * up
        # Partial down projection for this I chunk, fp32 accumulate.
        part = jnp.dot(h.astype(wd_ref.dtype), wd_ref[...],
                       preferred_element_type=jnp.float32)               # (tm, Hp)

        # First chunk: direct assign (no zero-fill + RMW pass).
        @pl.when(k == 0)
        def _():
            acc_ref[...] = part

        @pl.when(k > 0)
        def _():
            acc_ref[...] += part

        @pl.when(k == pl.num_programs(1) - 1)
        def _():
            o_ref[...] = acc_ref[...].astype(o_ref.dtype)

    return kernel


# ---------------------------------------------------------------------------
# One-time weight repacking (do this at parameter-load time, NOT per call).
# ---------------------------------------------------------------------------
def prepare_samba_mlp_weights(w_gate_full, w_down, *, tk=None,
                              compute_dtype=jnp.bfloat16):
    """w_gate_full: (2*I, H) PyTorch gate_proj.weight (first I rows = gate).
    w_down:        (H, I)   PyTorch down_proj.weight.

    Returns (wgu, wd, meta):
      wgu: (I//tk, Hp, 2*tk)  chunk-major; per chunk columns = [gate | up],
           so one contiguous BlockSpec slab gives both halves of a chunk.
      wd : (I//tk, tk, Hp)    chunk-major transposed down-proj weight.
    """
    two_i, H = w_gate_full.shape
    I = two_i // 2
    assert I % 128 == 0, "intermediate size must be a multiple of 128"
    Hp = _round_up(H, 128)

    if tk is None:
        tk = _tpu_config()[1]["tk"]
    # Clamp tk: multiple of 128, >= 128, divides I exactly.
    tk = min(int(tk), I)
    tk = max(128, (tk // 128) * 128)
    while I % tk and tk > 128:
        tk -= 128
    assert tk >= 128 and I % tk == 0
    n_chunks = I // tk

    w_t = jnp.transpose(w_gate_full).astype(compute_dtype)          # (H, 2I)
    if Hp != H:
        w_t = jnp.pad(w_t, ((0, Hp - H), (0, 0)))
    wg = w_t[:, :I].reshape(Hp, n_chunks, tk)                       # gate halves
    wu = w_t[:, I:].reshape(Hp, n_chunks, tk)                       # up halves
    wgu = jnp.concatenate([wg, wu], axis=-1)                        # (Hp, nI, 2tk)
    wgu = jnp.transpose(wgu, (1, 0, 2))                             # (nI, Hp, 2tk)

    wd = jnp.transpose(w_down).astype(compute_dtype)                # (I, H)
    if Hp != H:
        wd = jnp.pad(wd, ((0, 0), (0, Hp - H)))
    wd = wd.reshape(n_chunks, tk, Hp)                               # (nI, tk, Hp)

    meta = dict(H=H, Hp=Hp, I=I, tk=tk, n_chunks=n_chunks,
                compute_dtype=compute_dtype)
    return wgu, wd, meta


# ---------------------------------------------------------------------------
# Wrapper
# ---------------------------------------------------------------------------
def samba_mlp_pallas(x, wgu, wd, meta, *, tm=None, out_dtype=None,
                     vmem_limit_bytes=None):
    """x: (B, S, H).  wgu/wd/meta from prepare_samba_mlp_weights.

    out_dtype defaults to the compute dtype (bf16): the fp32 VMEM accumulator
    already carries precision; pass out_dtype=jnp.float32 if the consumer
    genuinely needs fp32 (costs 2x output VMEM + HBM writeback).
    """
    B, S, H = x.shape
    assert H == meta["H"], "hidden size mismatch with prepared weights"
    Hp, tk, n_chunks = meta["Hp"], meta["tk"], meta["n_chunks"]
    compute_dtype = meta["compute_dtype"]

    gen, cfg = _tpu_config()
    if tm is None:
        tm = cfg["tm"]
    if out_dtype is None:
        out_dtype = compute_dtype
    act_dtype = cfg["act_dtype"]

    M = B * S
    # Multiple of 16 (bf16 sublane packing); don't over-pad tiny problems.
    tm = max(16, min(_round_up(int(tm), 16), _round_up(M, 16)))
    # v7x: two TensorCores share the "parallel" M axis -- make sure there are
    # at least two row tiles so neither core idles.
    if gen == "v7x" and _round_up(M, tm) // tm == 1 and M > 16:
        tm = max(16, _round_up((M + 1) // 2, 16))
    Mp = _round_up(M, tm)

    # Keep activations bf16 upstream to make the cast a no-op; skip pad/slice
    # entirely when shapes are already aligned (common production case).
    x2d = x.reshape(M, H)
    if x2d.dtype != compute_dtype:
        x2d = x2d.astype(compute_dtype)
    padded = (Mp != M) or (Hp != H)
    if padded:
        x2d = jnp.pad(x2d, ((0, Mp - M), (0, Hp - H)))

    if vmem_limit_bytes is None:
        vmem_limit_bytes = _vmem_budget(cfg)
    cp_kwargs = dict(dimension_semantics=("parallel", "arbitrary"))
    if vmem_limit_bytes:
        cp_kwargs["vmem_limit_bytes"] = int(vmem_limit_bytes)

    out2d = pl.pallas_call(
        _make_swiglu_kernel(act_dtype),
        out_shape=jax.ShapeDtypeStruct((Mp, Hp), out_dtype),
        grid_spec=pltpu.PrefetchScalarGridSpec(
            num_scalar_prefetch=0,
            grid=(Mp // tm, n_chunks),
            in_specs=[
                # x row tile, revisited across the I axis (no re-DMA)
                pl.BlockSpec((tm, Hp), lambda i, k: (i, 0)),
                # fused gate/up weight chunk, contiguous slab (chunk-major)
                pl.BlockSpec((None, Hp, 2 * tk), lambda i, k: (k, 0, 0)),
                # down-proj weight chunk, contiguous slab (chunk-major)
                pl.BlockSpec((None, tk, Hp), lambda i, k: (k, 0, 0)),
            ],
            out_specs=pl.BlockSpec((tm, Hp), lambda i, k: (i, 0)),
            scratch_shapes=[pltpu.VMEM((tm, Hp), jnp.float32)],  # fp32 accumulator
        ),
        compiler_params=pltpu.CompilerParams(**cp_kwargs),
    )(x2d, wgu, wd)

    if padded:
        out2d = out2d[:M, :H]
    return out2d.reshape(B, S, H)


# ---------------------------------------------------------------------------
# Pure-JAX reference (fp32) of the PyTorch forward
# ---------------------------------------------------------------------------
def _reference(x, w_gate_full, w_down):
    y = jnp.einsum("bsh,oh->bso", x, w_gate_full)
    I = w_gate_full.shape[0] // 2
    gate, up = y[..., :I], y[..., I:]
    h = jax.nn.silu(gate) * up
    return jnp.einsum("bsi,hi->bsh", h, w_down)


if __name__ == "__main__":
    # Module hyperparameters (small, consistent with SambaMLP.__init__).
    hidden_size = 32
    hidden_ratio = 4
    intermediate_size = int(hidden_size * hidden_ratio * 2 / 3)
    intermediate_size = 256 * ((intermediate_size + 256 - 1) // 256)  # -> 256

    batch, seq = 2, 8

    key = jax.random.PRNGKey(0)
    kx, kg, kd = jax.random.split(key, 3)

    x = jax.random.normal(kx, (batch, seq, hidden_size), dtype=jnp.float32)
    # Deterministic weight init (shapes follow nn.Linear: (out, in), no bias).
    w_gate_full = (jax.random.normal(kg, (2 * intermediate_size, hidden_size),
                                     dtype=jnp.float32)
                   / jnp.sqrt(hidden_size))
    w_down = (jax.random.normal(kd, (hidden_size, intermediate_size),
                                dtype=jnp.float32)
              / jnp.sqrt(intermediate_size))

    # One-time weight repack (outside the per-call path); tk auto-selected
    # per generation and clamped to the (tiny) intermediate size here.
    wgu, wd, meta = prepare_samba_mlp_weights(w_gate_full, w_down)

    out = samba_mlp_pallas(x, wgu, wd, meta)          # tm auto per generation
    out = jax.block_until_ready(out)

    ref = _reference(x, w_gate_full, w_down)
    assert out.shape == (batch, seq, hidden_size)
    # bf16 MXU inputs + bf16 silu/output with fp32 accumulation vs fp32 ref.
    assert jnp.allclose(out.astype(jnp.float32), ref, rtol=5e-2, atol=7e-2), \
        "mismatch vs reference"

    print("KERNEL_OK")
</pallas_src>

<mosaic_0001>
module attributes {stable_mosaic.version = 11 : i64} {
  func.func @kernel(%arg0: i32, %arg1: i32, %arg2: memref<16x128xbf16, #tpu.memory_space<vmem>>, %arg3: memref<1x128x512xbf16, #tpu.memory_space<vmem>>, %arg4: memref<1x256x128xbf16, #tpu.memory_space<vmem>>, %arg5: memref<16x128xbf16, #tpu.memory_space<vmem>>, %arg6: memref<16x128xf32, #tpu.memory_space<vmem>>) attributes {dimension_semantics = [#tpu.dimension_semantics<parallel>, #tpu.dimension_semantics<arbitrary>], iteration_bounds = array<i64: 1, 1>, scalar_prefetch = 0 : i64, scratch_operands = 1 : i64, tpu.core_type = #tpu.core_type<tc>, window_params = [{transform_indices = @transform_0, window_bounds = array<i64: 16, 128>}, {transform_indices = @transform_1, window_bounds = array<i64: 1, 128, 512>}, {transform_indices = @transform_2, window_bounds = array<i64: 1, 256, 128>}, {transform_indices = @transform_3, window_bounds = array<i64: 16, 128>}]} {
    %c0 = arith.constant 0 : index
    %c0_0 = arith.constant 0 : index
    %0 = vector.load %arg2[%c0, %c0_0] : memref<16x128xbf16, #tpu.memory_space<vmem>>, vector<16x128xbf16>
    %c0_1 = arith.constant 0 : index
    %c0_2 = arith.constant 0 : index
    %c0_3 = arith.constant 0 : index
    %1 = vector.load %arg3[%c0_1, %c0_2, %c0_3] : memref<1x128x512xbf16, #tpu.memory_space<vmem>>, vector<1x128x512xbf16>
    %2 = vector.shape_cast %1 : vector<1x128x512xbf16> to vector<128x512xbf16>
    %cst = arith.constant dense<0.000000e+00> : vector<16x512xf32>
    %3 = tpu.matmul %0, %2, %cst {dimension_numbers = #tpu.dot_dimension_numbers<[1], [0], [0], [1], [0, 0, 1, 1], [], []>} : vector<16x128xbf16>, vector<128x512xbf16>, vector<16x512xf32> -> vector<16x512xf32>
    %4 = vector.extract_strided_slice %3 {offsets = [0, 0], sizes = [16, 256], strides = [1, 1]} : vector<16x512xf32> to vector<16x256xf32>
    %5 = vector.extract_strided_slice %3 {offsets = [0, 256], sizes = [16, 256], strides = [1, 1]} : vector<16x512xf32> to vector<16x256xf32>
    %6 = arith.negf %4 : vector<16x256xf32>
    %7 = math.exp %6 : vector<16x256xf32>
    %cst_4 = arith.constant 1.000000e+00 : f32
    %8 = vector.broadcast %cst_4 : f32 to vector<16x256xf32>
    %9 = arith.addf %8, %7 : vector<16x256xf32>
    %10 = arith.divf %8, %9 : vector<16x256xf32>
    %11 = arith.mulf %4, %10 : vector<16x256xf32>
    %12 = arith.mulf %11, %5 : vector<16x256xf32>
    %13 = arith.truncf %12 : vector<16x256xf32> to vector<16x256xbf16>
    %c0_5 = arith.constant 0 : index
    %c0_6 = arith.constant 0 : index
    %c0_7 = arith.constant 0 : index
    %14 = vector.load %arg4[%c0_5, %c0_6, %c0_7] : memref<1x256x128xbf16, #tpu.memory_space<vmem>>, vector<1x256x128xbf16>
    %15 = vector.shape_cast %14 : vector<1x256x128xbf16> to vector<256x128xbf16>
    %cst_8 = arith.constant dense<0.000000e+00> : vector<16x128xf32>
    %16 = tpu.matmul %13, %15, %cst_8 {dimension_numbers = #tpu.dot_dimension_numbers<[1], [0], [0], [1], [0, 0, 1, 1], [], []>} : vector<16x256xbf16>, vector<256x128xbf16>, vector<16x128xf32> -> vector<16x128xf32>
    %c0_i32 = arith.constant 0 : i32
    %17 = arith.cmpi eq, %arg1, %c0_i32 : i32
    %18 = arith.extui %17 : i1 to i32
    %c0_i32_9 = arith.constant 0 : i32
    %19 = arith.cmpi ne, %18, %c0_i32_9 : i32
    scf.if %19 {
      %c0_14 = arith.constant 0 : index
      %c0_15 = arith.constant 0 : index
      %26 = vector.load %arg6[%c0_14, %c0_15] : memref<16x128xf32, #tpu.memory_space<vmem>>, vector<16x128xf32>
      tpu.vector_store %arg6[%c0_14, %c0_15], %16 {strides = array<i32>} : memref<16x128xf32, #tpu.memory_space<vmem>>, vector<16x128xf32>,
    } else {
    }
    %c0_i32_10 = arith.constant 0 : i32
    %20 = arith.cmpi sgt, %arg1, %c0_i32_10 : i32
    %21 = arith.extui %20 : i1 to i32
    %c0_i32_11 = arith.constant 0 : i32
    %22 = arith.cmpi ne, %21, %c0_i32_11 : i32
    scf.if %22 {
      %c0_14 = arith.constant 0 : index
      %c0_15 = arith.constant 0 : index
      %26 = vector.load %arg6[%c0_14, %c0_15] : memref<16x128xf32, #tpu.memory_space<vmem>>, vector<16x128xf32>
      %27 = arith.addf %26, %16 : vector<16x128xf32>
      %c0_16 = arith.constant 0 : index
      %c0_17 = arith.constant 0 : index
      %28 = vector.load %arg6[%c0_16, %c0_17] : memref<16x128xf32, #tpu.memory_space<vmem>>, vector<16x128xf32>
      tpu.vector_store %arg6[%c0_16, %c0_17], %27 {strides = array<i32>} : memref<16x128xf32, #tpu.memory_space<vmem>>, vector<16x128xf32>,
    } else {
    }
    %c0_i32_12 = arith.constant 0 : i32
    %23 = arith.cmpi eq, %arg1, %c0_i32_12 : i32
    %24 = arith.extui %23 : i1 to i32
    %c0_i32_13 = arith.constant 0 : i32
    %25 = arith.cmpi ne, %24, %c0_i32_13 : i32
    scf.if %25 {
      %c0_14 = arith.constant 0 : index
      %c0_15 = arith.constant 0 : index
      %26 = vector.load %arg6[%c0_14, %c0_15] : memref<16x128xf32, #tpu.memory_space<vmem>>, vector<16x128xf32>
      %27 = arith.truncf %26 : vector<16x128xf32> to vector<16x128xbf16>
      %c0_16 = arith.constant 0 : index
      %c0_17 = arith.constant 0 : index
      %28 = vector.load %arg5[%c0_16, %c0_17] : memref<16x128xbf16, #tpu.memory_space<vmem>>, vector<16x128xbf16>
      tpu.vector_store %arg5[%c0_16, %c0_17], %27 {strides = array<i32>} : memref<16x128xbf16, #tpu.memory_space<vmem>>, vector<16x128xbf16>,
    } else {
    }
    return
  }
  func.func @transform_0(%arg0: i32, %arg1: i32) -> (i32, i32) {
    %c0_i32 = arith.constant 0 : i32
    %c0_i32_0 = arith.constant 0 : i32
    return %arg0, %c0_i32 : i32, i32
  }
  func.func @transform_1(%arg0: i32, %arg1: i32) -> (i32, i32, i32) {
    %c0_i32 = arith.constant 0 : i32
    %c0_i32_0 = arith.constant 0 : i32
    %c0_i32_1 = arith.constant 0 : i32
    return %arg1, %c0_i32, %c0_i32_0 : i32, i32, i32
  }
  func.func @transform_2(%arg0: i32, %arg1: i32) -> (i32, i32, i32) {
    %c0_i32 = arith.constant 0 : i32
    %c0_i32_0 = arith.constant 0 : i32
    %c0_i32_1 = arith.constant 0 : i32
    return %arg1, %c0_i32, %c0_i32_0 : i32, i32, i32
  }
  func.func @transform_3(%arg0: i32, %arg1: i32) -> (i32, i32) {
    %c0_i32 = arith.constant 0 : i32
    %c0_i32_0 = arith.constant 0 : i32
    return %arg0, %c0_i32 : i32, i32
  }
}

</mosaic_0001>

<llo_original>
// kernel: tpu_custom_call.1
$region0: #{tpu_custom_call.1}
  #allocation0 [shape = 'u32[]', space=smem, size = 0x4, offset = 0x4, fixed_abs, tag = 'smem constant byte address 0x4 - core index']
  #allocation1 [shape = 'u32[72,128]{1,0:T(1,128)}', space=vmem, size = 0x9000, scoped, tag = 'internal scratch']
  #allocation2 [shape = 'f32[16,128]{1,0:T(8,128)}', space=vmem, size = 0x2000, scoped, tag = 'scratch operand']
  %s0 = inlined_call_operand.hbm [shape: bf16[16,128], index: 0, kind: input, shape index: {}]
  %s1 = inlined_call_operand.hbm [shape: bf16[1,128,512], index: 1, kind: input, shape index: {}]
  %s2 = inlined_call_operand.hbm [shape: bf16[1,256,128], index: 2, kind: input, shape index: {}]
  %s3 = inlined_call_operand.hbm [shape: bf16[16,128], index: 3, kind: output, shape index: {}]
  %s4 = sld [smem:[#allocation0]]
  $region46: #{tpu_custom_call.1} parent=0
    _
  %s6 = ssub.s32 1, %s4
  %s7 = scalar_select 0, %s6, %s4
  $region1: #{tpu_custom_call.1} parent=0
    #allocation3 [shape = 'u8[4096]{0}', space=vmem, size = 0x1000, scoped, tag = 'input window, operand 0, single buffered']
    #allocation4 [shape = 's32[1]{0}', space=sflag, size = 0x4, scoped, tag = 'scoped memory for tpu_custom_call.1']
    #allocation5 [shape = 's32[1]{0}', space=sflag, size = 0x4, scoped, tag = 'scoped memory for tpu_custom_call.1']
    #allocation6 [shape = 'u8[131072]{0}', space=vmem, size = 0x20000, scoped, tag = 'input window, operand 1, single buffered']
    #allocation7 [shape = 's32[1]{0}', space=sflag, size = 0x4, scoped, tag = 'scoped memory for tpu_custom_call.1']
    #allocation8 [shape = 'u8[65536]{0}', space=vmem, size = 0x10000, scoped, tag = 'input window, operand 2, single buffered']
    #allocation9 [shape = 'u8[4096]{0}', space=vmem, size = 0x1000, scoped, tag = 'output window, operand 0, single buffered']
    %8 = vsyncpa [#allocation4], 0
    %9 = vsyncpa [#allocation7], 0
    %10 = vsyncpa [#allocation5], 0
    // Predicated region
    $region2: #{tpu_custom_call.1} parent=1 // pred_check
      _
    $region3: #{tpu_custom_call.1} parent=1 // pred_check_branch
      %12 = sbr.rel (0) target = $region5
    $region4: #{tpu_custom_call.1} parent=1 // pred_region
      %14 = vsyncadd [#allocation4], 0
      %s15 = sshll.u32 %s0, 4
      %s16 = int_to_ptr.hbm [resolvable:$true] %s15
      %s17 = sshll.u32 [#allocation3], 4
      %s18 = int_to_ptr.vmem [resolvable:$true] %s17
      %23 = dma.hbm_to_vmem [thread:$0]  %s16, 128, %s18, [#allocation4], 64, 64, 4
    $region5: #{tpu_custom_call.1} parent=1 // pred_fallthru
      _
    // Predicated region
    $region6: #{tpu_custom_call.1} parent=1 // pred_check
      _
    $region7: #{tpu_custom_call.1} parent=1 // pred_check_branch
      %25 = sbr.rel (0) target = $region9
    $region8: #{tpu_custom_call.1} parent=1 // pred_region
      %27 = vsyncadd [#allocation7], 0
      %s28 = sshll.u32 %s1, 4
      %s29 = int_to_ptr.hbm [resolvable:$true] %s28
      %s30 = sshll.u32 [#allocation6], 4
      %s31 = int_to_ptr.vmem [resolvable:$true] %s30
      %36 = dma.hbm_to_vmem [thread:$0]  %s29, 4096, %s31, [#allocation7], 256, 256, 16
    $region9: #{tpu_custom_call.1} parent=1 // pred_fallthru
      _
    // Predicated region
    $region10: #{tpu_custom_call.1} parent=1 // pred_check
      _
    $region11: #{tpu_custom_call.1} parent=1 // pred_check_branch
      %38 = sbr.rel (0) target = $region13
    $region12: #{tpu_custom_call.1} parent=1 // pred_region
      %40 = vsyncadd [#allocation7], 0
      %s41 = sshll.u32 %s2, 4
      %s42 = int_to_ptr.hbm [resolvable:$true] %s41
      %s43 = sshll.u32 [#allocation8], 4
      %s44 = int_to_ptr.vmem [resolvable:$true] %s43
      %49 = dma.hbm_to_vmem [thread:$0]  %s42, 2048, %s44, [#allocation7], 64, 64, 4
    $region13: #{tpu_custom_call.1} parent=1 // pred_fallthru
      _
    // Predicated region
    $region14: #{tpu_custom_call.1} parent=1 // pred_check
      _
    $region15: #{tpu_custom_call.1} parent=1 // pred_check_branch
      %51 = sbr.rel (0) target = $region17
    $region16: #{tpu_custom_call.1} parent=1 // pred_region
      %53 = dma.done [#allocation4], 128
    $region17: #{tpu_custom_call.1} parent=1 // pred_fallthru
      _
    // Predicated region
    $region18: #{tpu_custom_call.1} parent=1 // pred_check
      _
    $region19: #{tpu_custom_call.1} parent=1 // pred_check_branch
      %55 = sbr.rel (0) target = $region21
    $region20: #{tpu_custom_call.1} parent=1 // pred_region
      %57 = dma.done [#allocation7], 4096
    $region21: #{tpu_custom_call.1} parent=1 // pred_fallthru
      _
    // Predicated region
    $region22: #{tpu_custom_call.1} parent=1 // pred_check
      _
    $region23: #{tpu_custom_call.1} parent=1 // pred_check_branch
      %59 = sbr.rel (0) target = $region25
    $region24: #{tpu_custom_call.1} parent=1 // pred_region
      %61 = dma.done [#allocation7], 2048
    $region25: #{tpu_custom_call.1} parent=1 // pred_fallthru
      _
    %v62 = vld [vmem:[#allocation3] sm:$0xf]
    %v63 = vld [vmem:[#allocation3 + $0x4] sm:$0xf]
    %v64 = vld [vmem:[#allocation6] sm:$0xff]
    %v65 = vld [vmem:[#allocation6 + $0x8] sm:$0xff]
    %v66 = vld [vmem:[#allocation6 + $0x10] sm:$0xff]
    %v67 = vld [vmem:[#allocation6 + $0x18] sm:$0xff]
    %v68 = vld [vmem:[#allocation6 + $0x20] sm:$0xff]
    %v69 = vld [vmem:[#allocation6 + $0x28] sm:$0xff]
    %v70 = vld [vmem:[#allocation6 + $0x30] sm:$0xff]
    %v71 = vld [vmem:[#allocation6 + $0x38] sm:$0xff]
    %v72 = vld [vmem:[#allocation6 + $0x40] sm:$0xff]
    %v73 = vld [vmem:[#allocation6 + $0x48] sm:$0xff]
    %v74 = vld [vmem:[#allocation6 + $0x50] sm:$0xff]
    %v75 = vld [vmem:[#allocation6 + $0x58] sm:$0xff]
    %v76 = vld [vmem:[#allocation6 + $0x60] sm:$0xff]
    %v77 = vld [vmem:[#allocation6 + $0x68] sm:$0xff]
    %v78 = vld [vmem:[#allocation6 + $0x70] sm:$0xff]
    %v79 = vld [vmem:[#allocation6 + $0x78] sm:$0xff]
    %v80 = vld [vmem:[#allocation6 + $0x80] sm:$0xff]
    %v81 = vld [vmem:[#allocation6 + $0x88] sm:$0xff]
    %v82 = vld [vmem:[#allocation6 + $0x90] sm:$0xff]
    %v83 = vld [vmem:[#allocation6 + $0x98] sm:$0xff]
    %v84 = vld [vmem:[#allocation6 + $0xa0] sm:$0xff]
    %v85 = vld [vmem:[#allocation6 + $0xa8] sm:$0xff]
    %v86 = vld [vmem:[#allocation6 + $0xb0] sm:$0xff]
    %v87 = vld [vmem:[#allocation6 + $0xb8] sm:$0xff]
    %v88 = vld [vmem:[#allocation6 + $0xc0] sm:$0xff]
    %v89 = vld [vmem:[#allocation6 + $0xc8] sm:$0xff]
    %v90 = vld [vmem:[#allocation6 + $0xd0] sm:$0xff]
    %v91 = vld [vmem:[#allocation6 + $0xd8] sm:$0xff]
    %v92 = vld [vmem:[#allocation6 + $0xe0] sm:$0xff]
    %v93 = vld [vmem:[#allocation6 + $0xe8] sm:$0xff]
    %v94 = vld [vmem:[#allocation6 + $0xf0] sm:$0xff]
    %v95 = vld [vmem:[#allocation6 + $0xf8] sm:$0xff]
    %v98 = vunpack.c.l.b16 %v62
    %v99 = vunpack.c.l.b16 %v63
    %v100 = vpack.c.b16 %v99, %v98
    %v134 = vunpack.c.l.b16 %v64
    %v135 = vunpack.c.h.b16 %v64
    %v136 = vunpack.c.l.b16 %v65
    %v137 = vunpack.c.h.b16 %v65
    %v138 = vunpack.c.l.b16 %v66
    %v139 = vunpack.c.h.b16 %v66
    %v140 = vunpack.c.l.b16 %v67
    %v141 = vunpack.c.h.b16 %v67
    %v142 = vunpack.c.l.b16 %v68
    %v143 = vunpack.c.h.b16 %v68
    %v144 = vunpack.c.l.b16 %v69
    %v145 = vunpack.c.h.b16 %v69
    %v146 = vunpack.c.l.b16 %v70
    %v147 = vunpack.c.h.b16 %v70
    %v148 = vunpack.c.l.b16 %v71
    %v149 = vunpack.c.h.b16 %v71
    %v150 = vunpack.c.l.b16 %v72
    %v151 = vunpack.c.h.b16 %v72
    %v152 = vunpack.c.l.b16 %v73
    %v153 = vunpack.c.h.b16 %v73
    %v154 = vunpack.c.l.b16 %v74
    %v155 = vunpack.c.h.b16 %v74
    %v156 = vunpack.c.l.b16 %v75
    %v157 = vunpack.c.h.b16 %v75
    %v158 = vunpack.c.l.b16 %v76
    %v159 = vunpack.c.h.b16 %v76
    %v160 = vunpack.c.l.b16 %v77
    %v161 = vunpack.c.h.b16 %v77
    %v162 = vunpack.c.l.b16 %v78
    %v163 = vunpack.c.h.b16 %v78
    %v164 = vunpack.c.l.b16 %v79
    %v165 = vunpack.c.h.b16 %v79
    %v166 = vunpack.c.l.b16 %v80
    %v167 = vunpack.c.h.b16 %v80
    %v168 = vunpack.c.l.b16 %v81
    %v169 = vunpack.c.h.b16 %v81
    %v170 = vunpack.c.l.b16 %v82
    %v171 = vunpack.c.h.b16 %v82
    %v172 = vunpack.c.l.b16 %v83
    %v173 = vunpack.c.h.b16 %v83
    %v174 = vunpack.c.l.b16 %v84
    %v175 = vunpack.c.h.b16 %v84
    %v176 = vunpack.c.l.b16 %v85
    %v177 = vunpack.c.h.b16 %v85
    %v178 = vunpack.c.l.b16 %v86
    %v179 = vunpack.c.h.b16 %v86
    %v180 = vunpack.c.l.b16 %v87
    %v181 = vunpack.c.h.b16 %v87
    %v182 = vunpack.c.l.b16 %v88
    %v183 = vunpack.c.h.b16 %v88
    %v184 = vunpack.c.l.b16 %v89
    %v185 = vunpack.c.h.b16 %v89
    %v186 = vunpack.c.l.b16 %v90
    %v187 = vunpack.c.h.b16 %v90
    %v188 = vunpack.c.l.b16 %v91
    %v189 = vunpack.c.h.b16 %v91
    %v190 = vunpack.c.l.b16 %v92
    %v191 = vunpack.c.h.b16 %v92
    %v192 = vunpack.c.l.b16 %v93
    %v193 = vunpack.c.h.b16 %v93
    %v194 = vunpack.c.l.b16 %v94
    %v195 = vunpack.c.h.b16 %v94
    %v196 = vunpack.c.l.b16 %v95
    %v197 = vunpack.c.h.b16 %v95
    %v198 = vpack.c.b16 %v138, %v134
    %v199 = vpack.c.b16 %v139, %v135
    %v200 = vpack.c.b16 %v140, %v136
    %v201 = vpack.c.b16 %v141, %v137
    %v202 = vpack.c.b16 %v146, %v142
    %v203 = vpack.c.b16 %v147, %v143
    %v204 = vpack.c.b16 %v148, %v144
    %v205 = vpack.c.b16 %v149, %v145
    %v206 = vpack.c.b16 %v154, %v150
    %v207 = vpack.c.b16 %v155, %v151
    %v208 = vpack.c.b16 %v156, %v152
    %v209 = vpack.c.b16 %v157, %v153
    %v210 = vpack.c.b16 %v162, %v158
    %v211 = vpack.c.b16 %v163, %v159
    %v212 = vpack.c.b16 %v164, %v160
    %v213 = vpack.c.b16 %v165, %v161
    %v214 = vpack.c.b16 %v170, %v166
    %v215 = vpack.c.b16 %v171, %v167
    %v216 = vpack.c.b16 %v172, %v168
    %v217 = vpack.c.b16 %v173, %v169
    %v218 = vpack.c.b16 %v178, %v174
    %v219 = vpack.c.b16 %v179, %v175
    %v220 = vpack.c.b16 %v180, %v176
    %v221 = vpack.c.b16 %v181, %v177
    %v222 = vpack.c.b16 %v186, %v182
    %v223 = vpack.c.b16 %v187, %v183
    %v224 = vpack.c.b16 %v188, %v184
    %v225 = vpack.c.b16 %v189, %v185
    %v226 = vpack.c.b16 %v194, %v190
    %v227 = vpack.c.b16 %v195, %v191
    %v228 = vpack.c.b16 %v196, %v192
    %v229 = vpack.c.b16 %v197, %v193
    %262 = vmatpush.bf16.msra.mxu0 %v226
    %263 = vmatpush.bf16.msra.mxu0 %v222
    %264 = vmatpush.bf16.msra.mxu0 %v218
    %265 = vmatpush.bf16.msra.mxu0 %v214
    %266 = vmatpush.bf16.msra.mxu0 %v210
    %267 = vmatpush.bf16.msra.mxu0 %v206
    %268 = vmatpush.bf16.msra.mxu0 %v202
    %269 = vmatpush.bf16.msra.mxu0 %v198
    %270 = vmatmul.bf16.gmra.mxu0 %v100
    %v271 = vpop.f32.mrf.mxu0
    %v272 = vadd.f32 0.0, %v271
    %v273 = vpop.f32.mrf.mxu0
    %v274 = vadd.f32 0.0, %v273
    %275 = vdwg.mxu0
    %276 = vmatpush.bf16.msra.mxu0 %v227
    %277 = vmatpush.bf16.msra.mxu0 %v223
    %278 = vmatpush.bf16.msra.mxu0 %v219
    %279 = vmatpush.bf16.msra.mxu0 %v215
    %280 = vmatpush.bf16.msra.mxu0 %v211
    %281 = vmatpush.bf16.msra.mxu0 %v207
    %282 = vmatpush.bf16.msra.mxu0 %v203
    %283 = vmatpush.bf16.msra.mxu0 %v199
    %284 = vmatmul.bf16.gmra.mxu0 %v100
    %v285 = vpop.f32.mrf.mxu0
    %v286 = vadd.f32 0.0, %v285
    %v287 = vpop.f32.mrf.mxu0
    %v288 = vadd.f32 0.0, %v287
    %289 = vdwg.mxu0
    %290 = vmatpush.bf16.msra.mxu0 %v228
    %291 = vmatpush.bf16.msra.mxu0 %v224
    %292 = vmatpush.bf16.msra.mxu0 %v220
    %293 = vmatpush.bf16.msra.mxu0 %v216
    %294 = vmatpush.bf16.msra.mxu0 %v212
    %295 = vmatpush.bf16.msra.mxu0 %v208
    %296 = vmatpush.bf16.msra.mxu0 %v204
    %297 = vmatpush.bf16.msra.mxu0 %v200
    %298 = vmatmul.bf16.gmra.mxu0 %v100
    %v299 = vpop.f32.mrf.mxu0
    %v300 = vadd.f32 0.0, %v299
    %v301 = vpop.f32.mrf.mxu0
    %v302 = vadd.f32 0.0, %v301
    %303 = vdwg.mxu0
    %304 = vmatpush.bf16.msra.mxu0 %v229
    %305 = vmatpush.bf16.msra.mxu0 %v225
    %306 = vmatpush.bf16.msra.mxu0 %v221
    %307 = vmatpush.bf16.msra.mxu0 %v217
    %308 = vmatpush.bf16.msra.mxu0 %v213
    %309 = vmatpush.bf16.msra.mxu0 %v209
    %310 = vmatpush.bf16.msra.mxu0 %v205
    %311 = vmatpush.bf16.msra.mxu0 %v201
    %312 = vmatmul.bf16.gmra.mxu0 %v100
    %v313 = vpop.f32.mrf.mxu0
    %v314 = vadd.f32 0.0, %v313
    %v315 = vpop.f32.mrf.mxu0
    %v316 = vadd.f32 0.0, %v315
    %317 = vdwg.mxu0
    %v318 = vxor.u32 %v272, 2147483648
    %v319 = vxor.u32 %v286, 2147483648
    %v320 = vxor.u32 %v274, 2147483648
    %v321 = vxor.u32 %v288, 2147483648
    %v322 = vmul.f32 %v318, 1.442695
    %v323 = vpow.pop %v322
    %v324 = vmul.f32 %v319, 1.442695
    %v325 = vpow.pop %v324
    %v326 = vmul.f32 %v320, 1.442695
    %v327 = vpow.pop %v326
    %v328 = vmul.f32 %v321, 1.442695
    %v329 = vpow.pop %v328
    %v330 = vadd.f32 %v323, 1.0
    %v331 = vadd.f32 %v325, 1.0
    %v332 = vadd.f32 %v327, 1.0
    %v333 = vadd.f32 %v329, 1.0
    %v334 = vrcp.pop %v330
    %v335 = vmul.f32 %v330, %v334
    %v336 = vsub.f32 1.0, %v335
    %v337 = vmul.f32 %v334, %v336
    %v338 = vadd.f32 %v334, %v337
    %vm339 = vweird.f32 %v330
    %vm340 = vweird.f32 %v334
    %vm341 = vmor %vm339, %vm340
    %v342 = vsel %vm341, %v334, %v338
    %v343 = vand.u32 2147483647, %v330
    %vm344 = vcmp.eq.f32.partialorder %v343, 8.507059e+37
    %v345 = vand.u32 %v330, 2147483648
    %v346 = vor.u32 1.1754944e-38, %v345
    %v347 = vsel %vm344, %v346, %v342
    %v348 = vmul.f32 1.0, %v347
    %v349 = vrcp.pop %v331
    %v350 = vmul.f32 %v331, %v349
    %v351 = vsub.f32 1.0, %v350
    %v352 = vmul.f32 %v349, %v351
    %v353 = vadd.f32 %v349, %v352
    %vm354 = vweird.f32 %v331
    %vm355 = vweird.f32 %v349
    %vm356 = vmor %vm354, %vm355
    %v357 = vsel %vm356, %v349, %v353
    %v358 = vand.u32 2147483647, %v331
    %vm359 = vcmp.eq.f32.partialorder %v358, 8.507059e+37
    %v360 = vand.u32 %v331, 2147483648
    %v361 = vor.u32 1.1754944e-38, %v360
    %v362 = vsel %vm359, %v361, %v357
    %v363 = vmul.f32 1.0, %v362
    %v364 = vrcp.pop %v332
    %v365 = vmul.f32 %v332, %v364
    %v366 = vsub.f32 1.0, %v365
    %v367 = vmul.f32 %v364, %v366
    %v368 = vadd.f32 %v364, %v367
    %vm369 = vweird.f32 %v332
    %vm370 = vweird.f32 %v364
    %vm371 = vmor %vm369, %vm370
    %v372 = vsel %vm371, %v364, %v368
    %v373 = vand.u32 2147483647, %v332
    %vm374 = vcmp.eq.f32.partialorder %v373, 8.507059e+37
    %v375 = vand.u32 %v332, 2147483648
    %v376 = vor.u32 1.1754944e-38, %v375
    %v377 = vsel %vm374, %v376, %v372
    %v378 = vmul.f32 1.0, %v377
    %v379 = vrcp.pop %v333
    %v380 = vmul.f32 %v333, %v379
    %v381 = vsub.f32 1.0, %v380
    %v382 = vmul.f32 %v379, %v381
    %v383 = vadd.f32 %v379, %v382
    %vm384 = vweird.f32 %v333
    %vm385 = vweird.f32 %v379
    %vm386 = vmor %vm384, %vm385
    %v387 = vsel %vm386, %v379, %v383
    %v388 = vand.u32 2147483647, %v333
    %vm389 = vcmp.eq.f32.partialorder %v388, 8.507059e+37
    %v390 = vand.u32 %v333, 2147483648
    %v391 = vor.u32 1.1754944e-38, %v390
    %v392 = vsel %vm389, %v391, %v387
    %v393 = vmul.f32 1.0, %v392
    %v394 = vmul.f32 %v272, %v348
    %v395 = vmul.f32 %v286, %v363
    %v396 = vmul.f32 %v274, %v378
    %v397 = vmul.f32 %v288, %v393
    %v398 = vmul.f32 %v394, %v300
    %v399 = vmul.f32 %v395, %v314
    %v400 = vmul.f32 %v396, %v302
    %v401 = vmul.f32 %v397, %v316
    %v402 = vpack.c.bf16 %v400, %v398
    %v403 = vpack.c.bf16 %v401, %v399
    %v404 = vld [vmem:[#allocation8] sm:$0xf]
    %v405 = vld [vmem:[#allocation8 + $0x4] sm:$0xf]
    %v406 = vld [vmem:[#allocation8 + $0x8] sm:$0xf]
    %v407 = vld [vmem:[#allocation8 + $0xc] sm:$0xf]
    %v408 = vld [vmem:[#allocation8 + $0x10] sm:$0xf]
    %v409 = vld [vmem:[#allocation8 + $0x14] sm:$0xf]
    %v410 = vld [vmem:[#allocation8 + $0x18] sm:$0xf]
    %v411 = vld [vmem:[#allocation8 + $0x1c] sm:$0xf]
    %v412 = vld [vmem:[#allocation8 + $0x20] sm:$0xf]
    %v413 = vld [vmem:[#allocation8 + $0x24] sm:$0xf]
    %v414 = vld [vmem:[#allocation8 + $0x28] sm:$0xf]
    %v415 = vld [vmem:[#allocation8 + $0x2c] sm:$0xf]
    %v416 = vld [vmem:[#allocation8 + $0x30] sm:$0xf]
    %v417 = vld [vmem:[#allocation8 + $0x34] sm:$0xf]
    %v418 = vld [vmem:[#allocation8 + $0x38] sm:$0xf]
    %v419 = vld [vmem:[#allocation8 + $0x3c] sm:$0xf]
    %v420 = vld [vmem:[#allocation8 + $0x40] sm:$0xf]
    %v421 = vld [vmem:[#allocation8 + $0x44] sm:$0xf]
    %v422 = vld [vmem:[#allocation8 + $0x48] sm:$0xf]
    %v423 = vld [vmem:[#allocation8 + $0x4c] sm:$0xf]
    %v424 = vld [vmem:[#allocation8 + $0x50] sm:$0xf]
    %v425 = vld [vmem:[#allocation8 + $0x54] sm:$0xf]
    %v426 = vld [vmem:[#allocation8 + $0x58] sm:$0xf]
    %v427 = vld [vmem:[#allocation8 + $0x5c] sm:$0xf]
    %v428 = vld [vmem:[#allocation8 + $0x60] sm:$0xf]
    %v429 = vld [vmem:[#allocation8 + $0x64] sm:$0xf]
    %v430 = vld [vmem:[#allocation8 + $0x68] sm:$0xf]
    %v431 = vld [vmem:[#allocation8 + $0x6c] sm:$0xf]
    %v432 = vld [vmem:[#allocation8 + $0x70] sm:$0xf]
    %v433 = vld [vmem:[#allocation8 + $0x74] sm:$0xf]
    %v434 = vld [vmem:[#allocation8 + $0x78] sm:$0xf]
    %v435 = vld [vmem:[#allocation8 + $0x7c] sm:$0xf]
    %v468 = vunpack.c.l.b16 %v404
    %v469 = vunpack.c.l.b16 %v405
    %v470 = vunpack.c.l.b16 %v406
    %v471 = vunpack.c.l.b16 %v407
    %v472 = vunpack.c.l.b16 %v408
    %v473 = vunpack.c.l.b16 %v409
    %v474 = vunpack.c.l.b16 %v410
    %v475 = vunpack.c.l.b16 %v411
    %v476 = vunpack.c.l.b16 %v412
    %v477 = vunpack.c.l.b16 %v413
    %v478 = vunpack.c.l.b16 %v414
    %v479 = vunpack.c.l.b16 %v415
    %v480 = vunpack.c.l.b16 %v416
    %v481 = vunpack.c.l.b16 %v417
    %v482 = vunpack.c.l.b16 %v418
    %v483 = vunpack.c.l.b16 %v419
    %v484 = vunpack.c.l.b16 %v420
    %v485 = vunpack.c.l.b16 %v421
    %v486 = vunpack.c.l.b16 %v422
    %v487 = vunpack.c.l.b16 %v423
    %v488 = vunpack.c.l.b16 %v424
    %v489 = vunpack.c.l.b16 %v425
    %v490 = vunpack.c.l.b16 %v426
    %v491 = vunpack.c.l.b16 %v427
    %v492 = vunpack.c.l.b16 %v428
    %v493 = vunpack.c.l.b16 %v429
    %v494 = vunpack.c.l.b16 %v430
    %v495 = vunpack.c.l.b16 %v431
    %v496 = vunpack.c.l.b16 %v432
    %v497 = vunpack.c.l.b16 %v433
    %v498 = vunpack.c.l.b16 %v434
    %v499 = vunpack.c.l.b16 %v435
    %v500 = vpack.c.b16 %v469, %v468
    %v501 = vpack.c.b16 %v471, %v470
    %v502 = vpack.c.b16 %v473, %v472
    %v503 = vpack.c.b16 %v475, %v474
    %v504 = vpack.c.b16 %v477, %v476
    %v505 = vpack.c.b16 %v479, %v478
    %v506 = vpack.c.b16 %v481, %v480
    %v507 = vpack.c.b16 %v483, %v482
    %v508 = vpack.c.b16 %v485, %v484
    %v509 = vpack.c.b16 %v487, %v486
    %v510 = vpack.c.b16 %v489, %v488
    %v511 = vpack.c.b16 %v491, %v490
    %v512 = vpack.c.b16 %v493, %v492
    %v513 = vpack.c.b16 %v495, %v494
    %v514 = vpack.c.b16 %v497, %v496
    %v515 = vpack.c.b16 %v499, %v498
    %532 = vmatpush.bf16.msra.mxu0 %v507
    %533 = vmatpush.bf16.msra.mxu0 %v506
    %534 = vmatpush.bf16.msra.mxu0 %v505
    %535 = vmatpush.bf16.msra.mxu0 %v504
    %536 = vmatpush.bf16.msra.mxu0 %v503
    %537 = vmatpush.bf16.msra.mxu0 %v502
    %538 = vmatpush.bf16.msra.mxu0 %v501
    %539 = vmatpush.bf16.msra.mxu0 %v500
    %540 = vmatmul.bf16.gmra.mxu0 %v402
    %v541 = vpop.f32.mrf.mxu0
    %v542 = vadd.f32 0.0, %v541
    %v543 = vpop.f32.mrf.mxu0
    %v544 = vadd.f32 0.0, %v543
    %545 = vdwg.mxu0
    %546 = vmatpush.bf16.msra.mxu0 %v515
    %547 = vmatpush.bf16.msra.mxu0 %v514
    %548 = vmatpush.bf16.msra.mxu0 %v513
    %549 = vmatpush.bf16.msra.mxu0 %v512
    %550 = vmatpush.bf16.msra.mxu0 %v511
    %551 = vmatpush.bf16.msra.mxu0 %v510
    %552 = vmatpush.bf16.msra.mxu0 %v509
    %553 = vmatpush.bf16.msra.mxu0 %v508
    %554 = vmatmul.bf16.gmra.mxu0 %v403
    %v555 = vpop.f32.mrf.mxu0
    %v556 = vadd.f32 %v542, %v555
    %v557 = vpop.f32.mrf.mxu0
    %v558 = vadd.f32 %v544, %v557
    %559 = vdwg.mxu0
    %p560 = scmp.eq.s32.totalorder 0, 0
    // Predicated region
    $region26: #{tpu_custom_call.1} parent=1 // pred_check
      %p561 = pneg %p560
    $region27: #{tpu_custom_call.1} parent=1 // pred_check_branch
      %563 = sbr.rel (%p561) target = $region29
    $region28: #{tpu_custom_call.1} parent=1 // pred_region
      %564 = vst [vmem:[#allocation2] sm:$0xff] %v556
      %565 = vst [vmem:[#allocation2 + $0x8] sm:$0xff] %v558
    $region29: #{tpu_custom_call.1} parent=1 // pred_fallthru
      _
    %p566 = scmp.gt.s32.totalorder 0, 0
    // Predicated region
    $region30: #{tpu_custom_call.1} parent=1 // pred_check
      %p567 = pneg %p566
    $region31: #{tpu_custom_call.1} parent=1 // pred_check_branch
      %569 = sbr.rel (%p567) target = $region33
    $region32: #{tpu_custom_call.1} parent=1 // pred_region
      %v570 = vld [vmem:[#allocation2] sm:$0xff]
      %v571 = vld [vmem:[#allocation2 + $0x8] sm:$0xff]
      %v572 = vadd.f32 %v570, %v556
      %v573 = vadd.f32 %v571, %v558
      %574 = vst [vmem:[#allocation2] sm:$0xff] %v572
      %575 = vst [vmem:[#allocation2 + $0x8] sm:$0xff] %v573
    $region33: #{tpu_custom_call.1} parent=1 // pred_fallthru
      _
    // Predicated region
    $region34: #{tpu_custom_call.1} parent=1 // pred_check
      %p576 = pneg %p560
    $region35: #{tpu_custom_call.1} parent=1 // pred_check_branch
      %578 = sbr.rel (%p576) target = $region37
    $region36: #{tpu_custom_call.1} parent=1 // pred_region
      %v579 = vld [vmem:[#allocation2] sm:$0xff]
      %v580 = vld [vmem:[#allocation2 + $0x8] sm:$0xff]
      %v581 = vpack.c.bf16 %v579, %v579
      %v582 = vpack.c.bf16 %v580, %v580
      %583 = vst [vmem:[#allocation9] sm:$0xf] %v581
      %584 = vst [vmem:[#allocation9 + $0x4] sm:$0xf] %v582
    $region37: #{tpu_custom_call.1} parent=1 // pred_fallthru
      _
    // Predicated region
    $region38: #{tpu_custom_call.1} parent=1 // pred_check
      _
    $region39: #{tpu_custom_call.1} parent=1 // pred_check_branch
      %586 = sbr.rel (0) target = $region41
    $region40: #{tpu_custom_call.1} parent=1 // pred_region
      %588 = vsyncadd [#allocation5], 0
      %s589 = sshll.u32 [#allocation9], 4
      %s590 = int_to_ptr.vmem [resolvable:$true] %s589
      %s591 = sshll.u32 %s3, 4
      %s592 = int_to_ptr.hbm [resolvable:$true] %s591
      %597 = dma.vmem_to_hbm [thread:$0]  %s590, 128, %s592, [#allocation5], 64, 64, 4
    $region41: #{tpu_custom_call.1} parent=1 // pred_fallthru
      _
    // Predicated region
    $region42: #{tpu_custom_call.1} parent=1 // pred_check
      _
    $region43: #{tpu_custom_call.1} parent=1 // pred_check_branch
      %599 = sbr.rel (0) target = $region45
    $region44: #{tpu_custom_call.1} parent=1 // pred_region
      %601 = dma.done [#allocation5], 128
    $region45: #{tpu_custom_call.1} parent=1 // pred_fallthru
      _
    %602 = vsyncpa [#allocation4], 1
    %603 = vsyncpa [#allocation7], 1
    %604 = vsyncpa [#allocation5], 1

</llo_original>
